<compile_context>
chip_gen: v7x
topology: tpu7x:2x2x1
jax: 0.10.0
libtpu: 0.0.40
codegen_flags: <defaults>
</compile_context>

<pallas_src>
import jax
import jax.numpy as jnp
from jax.experimental import pallas as pl
from jax.experimental.pallas import tpu as pltpu


def _round_up(x: int, m: int) -> int:
    return ((x + m - 1) // m) * m


def _accuracy_ce_kernel(x_ref, t_ref, o_ref):
    # x_ref: (TN, C) logits in native dtype
    # t_ref: (TN, 1) int32 labels (padded rows carry -1 and never match)
    # o_ref: (8, 128) float32 partial-sum block for this core; count at [0, 0]
    step = pl.program_id(1)

    @pl.when(step == 0)
    def _():
        o_ref[...] = jnp.zeros_like(o_ref)

    x = x_ref[...]
    t = t_ref[...]
    n, c = x.shape

    # argmax along the class (lane) axis with first-occurrence tie-break,
    # matching torch.argmax / jnp.argmax.
    col = jax.lax.broadcasted_iota(jnp.int32, (n, c), 1)
    row_max = jnp.max(x, axis=1, keepdims=True)            # (TN, 1)
    idx = jnp.where(x == row_max, col, jnp.int32(c))       # non-max -> sentinel C
    argmax = jnp.min(idx, axis=1, keepdims=True)           # (TN, 1) int32

    correct = (argmax == t).astype(jnp.float32)            # (TN, 1)
    partial = jnp.sum(correct, axis=0, keepdims=True)      # (1, 1)
    o_ref[0:1, 0:1] = o_ref[0:1, 0:1] + partial


def accuracy_ce(logits: jax.Array, target: jax.Array, *, block_rows: int | None = None) -> jax.Array:
    """Pallas equivalent of AccuracyCE.forward(input, target) -> scalar float32."""
    n, c = logits.shape
    x = logits                                   # keep native dtype (no HBM upcast pass)
    t = target.astype(jnp.int32).reshape(n, 1)

    itemsize = jnp.dtype(x.dtype).itemsize
    if block_rows is None:
        # One logits block ~<= 4 MiB; with double buffering this stays well
        # under scoped VMEM on v5e/v6e/v7x while keeping tiles large.
        budget = 4 * 1024 * 1024
        tn = (budget // max(1, c * itemsize)) // 8 * 8
        tn = int(max(8, min(tn, 1024)))
    else:
        tn = int(max(8, _round_up(block_rows, 8)))
    tn = min(tn, _round_up(n, 8))

    # Two partial sums along a leading "parallel" axis -> v7x megacore can split
    # them across its 2 TensorCores. Single block -> no point splitting.
    num_blocks = (n + tn - 1) // tn
    num_cores = 2 if num_blocks >= 2 else 1
    n_pad = _round_up(n, num_cores * tn)
    steps = n_pad // (num_cores * tn)

    if n_pad != n:
        # Padded rows: zero logits, label -1 -> argmax (>= 0) never matches.
        x = jnp.pad(x, ((0, n_pad - n), (0, 0)))
        t = jnp.pad(t, ((0, n_pad - n), (0, 0)), constant_values=-1)

    row_block = lambda p, s: (p * steps + s, 0)

    out = pl.pallas_call(
        _accuracy_ce_kernel,
        out_shape=jax.ShapeDtypeStruct((num_cores * 8, 128), jnp.float32),
        grid_spec=pltpu.PrefetchScalarGridSpec(
            num_scalar_prefetch=0,
            grid=(num_cores, steps),
            in_specs=[
                pl.BlockSpec((tn, c), row_block),
                pl.BlockSpec((tn, 1), row_block),
            ],
            out_specs=pl.BlockSpec((8, 128), lambda p, s: (p, 0)),
        ),
        compiler_params=pltpu.CompilerParams(
            dimension_semantics=("parallel", "arbitrary"),
            vmem_limit_bytes=32 * 1024 * 1024,
        ),
    )(x, t)

    # Each core's count sits at [8*p, 0]; everything else is zero.
    return jnp.sum(out)


if __name__ == "__main__":
    key = jax.random.PRNGKey(0)
    k1, k2, k3, k4 = jax.random.split(key, 4)

    # Small case matching the module's forward: (N, C) logits, (N,) int labels.
    N, C = 8, 32
    logits = jax.random.normal(k1, (N, C), dtype=jnp.float32)
    target = jax.random.randint(k2, (N,), 0, C, dtype=jnp.int32)

    result = jax.block_until_ready(accuracy_ce(logits, target))
    ref = jnp.sum((jnp.argmax(logits, axis=1) == target).astype(jnp.float32))
    assert result.shape == () and result.dtype == jnp.float32
    assert jnp.array_equal(result, ref), (result, ref)

    # Multi-block case: exercises the row grid, 2-way partial sums, padding,
    # and native-bf16 loads.
    N2, C2 = 200, 16
    logits2 = jax.random.normal(k3, (N2, C2), dtype=jnp.bfloat16)
    target2 = jax.random.randint(k4, (N2,), 0, C2, dtype=jnp.int32)

    result2 = jax.block_until_ready(accuracy_ce(logits2, target2, block_rows=16))
    ref2 = jnp.sum((jnp.argmax(logits2, axis=1) == target2).astype(jnp.float32))
    assert jnp.array_equal(result2, ref2), (result2, ref2)

    print("KERNEL_OK")
</pallas_src>

<mosaic_0001>
module attributes {stable_mosaic.version = 11 : i64} {
  func.func @_accuracy_ce_kernel(%arg0: i32, %arg1: i32, %arg2: memref<8x32xf32, #tpu.memory_space<vmem>>, %arg3: memref<8x1xi32, #tpu.memory_space<vmem>>, %arg4: memref<8x128xf32, #tpu.memory_space<vmem>>) attributes {dimension_semantics = [#tpu.dimension_semantics<parallel>, #tpu.dimension_semantics<arbitrary>], iteration_bounds = array<i64: 1, 1>, scalar_prefetch = 0 : i64, scratch_operands = 0 : i64, tpu.core_type = #tpu.core_type<tc>, window_params = [{transform_indices = @transform_0, window_bounds = array<i64: 8, 32>}, {transform_indices = @transform_1, window_bounds = array<i64: 8, 1>}, {transform_indices = @transform_2, window_bounds = array<i64: 8, 128>}]} {
    %c0_i32 = arith.constant 0 : i32
    %0 = arith.cmpi eq, %arg1, %c0_i32 : i32
    %1 = arith.extui %0 : i1 to i32
    %c0_i32_0 = arith.constant 0 : i32
    %2 = arith.cmpi ne, %1, %c0_i32_0 : i32
    scf.if %2 {
      %cst_10 = arith.constant 0.000000e+00 : f32
      %22 = vector.broadcast %cst_10 : f32 to vector<8x128xf32>
      %c0_11 = arith.constant 0 : index
      %c0_12 = arith.constant 0 : index
      %23 = vector.load %arg4[%c0_11, %c0_12] : memref<8x128xf32, #tpu.memory_space<vmem>>, vector<8x128xf32>
      tpu.vector_store %arg4[%c0_11, %c0_12], %22 {strides = array<i32>} : memref<8x128xf32, #tpu.memory_space<vmem>>, vector<8x128xf32>,
    } else {
    }
    %c0 = arith.constant 0 : index
    %c0_1 = arith.constant 0 : index
    %3 = vector.load %arg2[%c0, %c0_1] : memref<8x32xf32, #tpu.memory_space<vmem>>, vector<8x32xf32>
    %c0_2 = arith.constant 0 : index
    %c0_3 = arith.constant 0 : index
    %4 = vector.load %arg3[%c0_2, %c0_3] : memref<8x1xi32, #tpu.memory_space<vmem>>, vector<8x1xi32>
    %5 = tpu.iota {dimensions = array<i32: 1>} : vector<8x32xi32>
    %cst = arith.constant dense<0xFF800000> : vector<8xf32>
    %6 = vector.multi_reduction <maximumf>, %3, %cst [1] : vector<8x32xf32> to vector<8xf32>
    %7 = vector.shape_cast %6 : vector<8xf32> to vector<8x1xf32>
    %8 = vector.broadcast %7 : vector<8x1xf32> to vector<8x32xf32>
    %9 = arith.cmpf oeq, %3, %8 : vector<8x32xf32>
    %c32_i32 = arith.constant 32 : i32
    %10 = vector.broadcast %c32_i32 : i32 to vector<8x32xi32>
    %11 = arith.select %9, %5, %10 : vector<8x32xi1>, vector<8x32xi32>
    %cst_4 = arith.constant dense<2147483647> : vector<8xi32>
    %12 = vector.multi_reduction <minsi>, %11, %cst_4 [1] : vector<8x32xi32> to vector<8xi32>
    %13 = vector.shape_cast %12 : vector<8xi32> to vector<8x1xi32>
    %14 = arith.cmpi eq, %13, %4 : vector<8x1xi32>
    %15 = arith.extui %14 : vector<8x1xi1> to vector<8x1xi32>
    %16 = arith.sitofp %15 : vector<8x1xi32> to vector<8x1xf32>
    %cst_5 = arith.constant dense<0.000000e+00> : vector<1xf32>
    %17 = vector.multi_reduction <add>, %16, %cst_5 [0] : vector<8x1xf32> to vector<1xf32>
    %18 = vector.shape_cast %17 : vector<1xf32> to vector<1x1xf32>
    %c0_6 = arith.constant 0 : index
    %c0_7 = arith.constant 0 : index
    %19 = vector.load %arg4[%c0_6, %c0_7] : memref<8x128xf32, #tpu.memory_space<vmem>>, vector<1x1xf32>
    %20 = arith.addf %19, %18 : vector<1x1xf32>
    %c0_8 = arith.constant 0 : index
    %c0_9 = arith.constant 0 : index
    %21 = vector.load %arg4[%c0_8, %c0_9] : memref<8x128xf32, #tpu.memory_space<vmem>>, vector<1x1xf32>
    tpu.vector_store %arg4[%c0_8, %c0_9], %20 {strides = array<i32>} : memref<8x128xf32, #tpu.memory_space<vmem>>, vector<1x1xf32>,
    return
  }
  func.func @transform_0(%arg0: i32, %arg1: i32) -> (i32, i32) {
    %c1_i32 = arith.constant 1 : i32
    %0 = arith.muli %arg0, %c1_i32 : i32
    %1 = arith.addi %0, %arg1 : i32
    %c0_i32 = arith.constant 0 : i32
    %c0_i32_0 = arith.constant 0 : i32
    return %1, %c0_i32 : i32, i32
  }
  func.func @transform_1(%arg0: i32, %arg1: i32) -> (i32, i32) {
    %c1_i32 = arith.constant 1 : i32
    %0 = arith.muli %arg0, %c1_i32 : i32
    %1 = arith.addi %0, %arg1 : i32
    %c0_i32 = arith.constant 0 : i32
    %c0_i32_0 = arith.constant 0 : i32
    return %1, %c0_i32 : i32, i32
  }
  func.func @transform_2(%arg0: i32, %arg1: i32) -> (i32, i32) {
    %c0_i32 = arith.constant 0 : i32
    %c0_i32_0 = arith.constant 0 : i32
    return %arg0, %c0_i32 : i32, i32
  }
}

</mosaic_0001>

<llo_original>
// kernel: tpu_custom_call.1
$region0: #{tpu_custom_call.1}
  #allocation0 [shape = 'u32[]', space=smem, size = 0x4, offset = 0x4, fixed_abs, tag = 'smem constant byte address 0x4 - core index']
  #allocation1 [shape = 'u32[144,128]{1,0:T(1,128)}', space=vmem, size = 0x12000, scoped, tag = 'internal scratch']
  %s0 = inlined_call_operand.vmem [shape: f32[8,32], index: 0, kind: input, shape index: {}]
  %s1 = inlined_call_operand.vmem [shape: s32[8,1], index: 1, kind: input, shape index: {}]
  %s2 = inlined_call_operand.hbm [shape: f32[8,128], index: 2, kind: output, shape index: {}]
  %s3 = sld [smem:[#allocation0]]
  $region22: #{tpu_custom_call.1} parent=0
    _
  %s5 = ssub.s32 1, %s3
  %s6 = scalar_select 0, %s5, %s3
  $region1: #{tpu_custom_call.1} parent=0
    #allocation2 [shape = 'u8[4096]{0}', space=vmem, size = 0x1000, scoped, tag = 'output window, operand 0, single buffered']
    #allocation3 [shape = 's32[1]{0}', space=sflag, size = 0x4, scoped, tag = 'scoped memory for tpu_custom_call.1']
    %7 = vsyncpa [#allocation3], 0
    // Predicated region
    $region2: #{tpu_custom_call.1} parent=1 // pred_check
      _
    $region3: #{tpu_custom_call.1} parent=1 // pred_check_branch
      %9 = sbr.rel (0) target = $region5
    $region4: #{tpu_custom_call.1} parent=1 // pred_region
      %s10 = sadd.s32 0, 0
      %p11 = scmp.lt.s32.totalorder %s10, 0
      %s12 = scalar_select %p11, %s10, 0
      %s13 = smul.addr %s12, 8
      %s14 = scalar_lea.vmem %s0, %s13
      %s15 = sadd.s32 0, 0
    $region5: #{tpu_custom_call.1} parent=1 // pred_fallthru
      _
    // Predicated region
    $region6: #{tpu_custom_call.1} parent=1 // pred_check
      _
    $region7: #{tpu_custom_call.1} parent=1 // pred_check_branch
      %17 = sbr.rel (0) target = $region9
    $region8: #{tpu_custom_call.1} parent=1 // pred_region
      %s18 = sadd.s32 0, 0
      %p19 = scmp.lt.s32.totalorder %s18, 0
      %s20 = scalar_select %p19, %s18, 0
      %s21 = smul.addr %s20, 8
      %s22 = scalar_lea.vmem %s1, %s21
      %s23 = sadd.s32 0, 0
    $region9: #{tpu_custom_call.1} parent=1 // pred_fallthru
      _
    %s24 = sadd.s32 0, 0
    %p25 = scmp.lt.s32.totalorder %s24, 0
    %s26 = scalar_select %p25, %s24, 0
    %s27 = smul.addr %s26, 8
    %s28 = scalar_lea.vmem %s0, %s27
    %s29 = sadd.s32 0, 0
    %p30 = scmp.lt.s32.totalorder %s29, 0
    %s31 = scalar_select %p30, %s29, 0
    %s32 = smul.addr %s31, 8
    %s33 = scalar_lea.vmem %s1, %s32
    %s34 = sadd.s32 0, 0
    %p35 = scmp.lt.s32.totalorder %s34, 0
    %s36 = scalar_select %p35, %s34, 0
    %s37 = smul.addr %s36, 8
    %s38 = scalar_lea.vmem %s0, %s37
    %s39 = sadd.s32 0, 0
    %s40 = sadd.s32 0, 0
    %p41 = scmp.lt.s32.totalorder %s40, 0
    %s42 = scalar_select %p41, %s40, 0
    %s43 = smul.addr %s42, 8
    %s44 = scalar_lea.vmem %s1, %s43
    %s45 = sadd.s32 0, 0
    %p46 = scmp.eq.s32.totalorder 0, 0
    // Predicated region
    $region10: #{tpu_custom_call.1} parent=1 // pred_check
      %p47 = pneg %p46
    $region11: #{tpu_custom_call.1} parent=1 // pred_check_branch
      %49 = sbr.rel (%p47) target = $region13
    $region12: #{tpu_custom_call.1} parent=1 // pred_region
      %50 = vst [vmem:[#allocation2] sm:$0xff] 0.0
    $region13: #{tpu_custom_call.1} parent=1 // pred_fallthru
      _
    %v51 = vld [vmem:[%s38] sm:$0xff]
    %v52 = vld [vmem:[%s44] sm:$0xff]
    %v53 = vlaneseq
    %v54 = vand.u32 %v53, 127
    %vm55 = vcmask 261120
    %v56 = vsel %vm55, %v51, -inf
    %57 = vmax.xlane.f32.xlu0 %v56
    %v58 = vpop.xlane.xlu0 %57
    %vm59 = vcmp.eq.f32.partialorder %v51, %v58
    %v60 = vsel %vm59, %v54, 32
    %v61 = vsel %vm55, %v60, 2147483647
    %v62 = vand.u32 %v61, 65535
    %v63 = vshra.s32 %v61, 16
    %v64 = vcvt.s32.f32 %v62
    %v65 = vcvt.s32.f32 %v63
    %66 = vmin.xlane.f32.xlu0 %v65
    %v67 = vpop.xlane.xlu0 %66
    %vm68 = vcmp.eq.f32.partialorder %v65, %v67
    %v69 = vsel %vm68, %v64, inf
    %70 = vmin.xlane.f32.xlu0 %v69
    %v71 = vpop.xlane.xlu0 %70
    %v72 = vcvt.f32.s32 %v71
    %v73 = vcvt.f32.s32 %v67
    %v74 = vshll.u32 %v73, 16
    %v75 = vadd.s32 %v74, %v72
    %vm76 = vcmp.eq.s32.totalorder %v75, %v52
    %v77 = vsel %vm76, 1, 0
    %v78 = vcvt.s32.f32 %v77
    %vm79 = vcmask 7168
    %v80 = vsel %vm79, %v78, 0.0
    %v81 = vrot.slane %v80, 4
    %v82 = vadd.f32 %v80, %v81
    %v83 = vrot.slane %v82, 2
    %v84 = vadd.f32 %v82, %v83
    %v85 = vrot.slane %v84, 1
    %v86 = vadd.f32 %v84, %v85
    %v87 = vld [vmem:[#allocation2] sm:$0x1]
    %v88 = vadd.f32 %v87, %v86
    %vm89 = vcmask 0
    %90 = vst.msk [vmem:[#allocation2] sm:$0x1] %vm89, %v88
    // Predicated region
    $region14: #{tpu_custom_call.1} parent=1 // pred_check
      _
    $region15: #{tpu_custom_call.1} parent=1 // pred_check_branch
      %92 = sbr.rel (0) target = $region17
    $region16: #{tpu_custom_call.1} parent=1 // pred_region
      %s94 = ssub.s32 128, 128
      %95 = vsyncadd [#allocation3], %s94
      %s97 = sshll.u32 [#allocation2], 4
      %s98 = int_to_ptr.vmem [resolvable:$true] %s97
      %100 = dma.vmem_to_hbm [thread:$0]  %s98, 128, %s2, [#allocation3]
    $region17: #{tpu_custom_call.1} parent=1 // pred_fallthru
      _
    // Predicated region
    $region18: #{tpu_custom_call.1} parent=1 // pred_check
      _
    $region19: #{tpu_custom_call.1} parent=1 // pred_check_branch
      %102 = sbr.rel (0) target = $region21
    $region20: #{tpu_custom_call.1} parent=1 // pred_region
      %103 = dma.done [#allocation3], 128
    $region21: #{tpu_custom_call.1} parent=1 // pred_fallthru
      _
    %104 = vsyncpa [#allocation3], 1

</llo_original>
